<compile_context>
chip_gen: v7x
topology: tpu7x:2x2x1
jax: 0.10.0
libtpu: 0.0.40
codegen_flags: <defaults>
</compile_context>

<pallas_src>
import jax
import jax.numpy as jnp
from jax import lax
from jax.experimental import pallas as pl
from jax.experimental.pallas import tpu as pltpu


def _round_up(x: int, m: int) -> int:
    return (x + m - 1) // m * m


def _default_vmem_limit() -> int:
    """Generation-aware scoped-VMEM budget (v5e/v6e: 128 MiB phys, v7x: 64 MiB)."""
    phys = 128 * 1024 * 1024
    try:
        info = pltpu.get_tpu_info()
        phys = int(getattr(info, "vmem_capacity_bytes", phys) or phys)
    except Exception:
        pass
    # Leave headroom for output/count buffers, acc scratch and Mosaic internals.
    return min(phys * 3 // 4, 96 * 1024 * 1024)


def _choose_tiles(C: int, D: int, itemsize: int, vmem_limit: int):
    """Co-select (tile_c, tile_d): client tile first, then fill VMEM with lanes."""
    D128 = _round_up(D, 128)
    tile_c = min(_round_up(C, 8), 512)          # typical FL: few clients -> round_up(C, 8)

    budget = vmem_limit // 2                    # weights' share; rest is headroom

    def max_tile_d(tc: int) -> int:
        # Per lane-column: double-buffered weights block + (8,*) f32 chunk temps
        # + (8,*) f32 accumulator + double-buffered output row.
        per_lane = tc * 2 * itemsize + 8 * 4 + 2 * itemsize + 96
        return max(128, (budget // per_lane) // 128 * 128)

    tile_d = max_tile_d(tile_c)
    # Keep lane tiles wide even if that means fewer client rows per block.
    while tile_d < min(512, D128) and tile_c > 8:
        tile_c = max(8, (tile_c // 2) // 8 * 8)
        tile_d = max_tile_d(tile_c)
    tile_d = min(tile_d, D128)
    # Megacore (v7x): keep >= 2 D tiles so both TensorCores get work.
    if D128 >= 256:
        tile_d = min(tile_d, _round_up(pl.cdiv(D, 2), 128))
    return tile_c, tile_d


def _make_kernel(C: int, tile_c: int, needs_row_mask: bool):
    def kernel(w_ref, n_ref, o_ref, acc_ref):
        # w_ref:   (tile_c, tile_d)  weights tile (boundary blocks may hold garbage)
        # n_ref:   (tile_c, 1)       pre-scaled counts n_i/total, f32, zero-padded
        # o_ref:   (1, tile_d)       output tile (resident across the client axis)
        # acc_ref: (8, tile_d)       f32 accumulator scratch
        c = pl.program_id(1)

        @pl.when(c == 0)
        def _():
            acc_ref[...] = jnp.zeros_like(acc_ref)

        n = n_ref[...]  # (tile_c, 1) f32
        if needs_row_mask:
            row = lax.broadcasted_iota(jnp.int32, (tile_c, 1), 0)
            valid = (c * tile_c + row) < C

        # Chunked accumulation over 8-sublane row groups: the widened f32
        # temporary is only (8, tile_d), and the cross-sublane reduce happens
        # once at finalize instead of every grid step.
        for r0 in range(0, tile_c, 8):
            w = w_ref[r0:r0 + 8, :].astype(jnp.float32)
            if needs_row_mask:
                # Garbage rows in boundary blocks may hold NaN/Inf -> mask them.
                w = jnp.where(valid[r0:r0 + 8, :], w, 0.0)
            acc_ref[...] += w * n[r0:r0 + 8, :]

        @pl.when(c == pl.num_programs(1) - 1)
        def _():
            o_ref[...] = jnp.sum(acc_ref[...], axis=0,
                                 keepdims=True).astype(o_ref.dtype)

    return kernel


def aggregate_model(weights: jax.Array, num_examples: jax.Array,
                    vmem_limit_bytes: int | None = None) -> jax.Array:
    """Weighted average of model params across clients (axis 0)."""
    C, D = weights.shape
    itemsize = weights.dtype.itemsize
    if vmem_limit_bytes is None:
        vmem_limit_bytes = _default_vmem_limit()

    tile_c, tile_d = _choose_tiles(C, D, itemsize, vmem_limit_bytes)
    grid_d = pl.cdiv(D, tile_d)
    grid_c = pl.cdiv(C, tile_c)

    # Hoist normalization: n_i / total in f32 (O(C)). Zero-pad the tiny count
    # vector to the client grid so its DMA is always in-bounds and padded rows
    # contribute exactly 0. The weights matrix itself is NOT padded.
    n_f32 = num_examples.astype(jnp.float32).reshape(C)
    total = jnp.sum(n_f32)
    n_scaled = (n_f32 / total).reshape(C, 1)
    c_blocks = grid_c * tile_c
    if c_blocks != C:
        n_scaled = jnp.pad(n_scaled, ((0, c_blocks - C), (0, 0)))

    kernel = _make_kernel(C, tile_c, needs_row_mask=(C % tile_c != 0))

    out = pl.pallas_call(
        kernel,
        out_shape=jax.ShapeDtypeStruct((1, D), weights.dtype),
        grid_spec=pltpu.PrefetchScalarGridSpec(
            num_scalar_prefetch=0,
            grid=(grid_d, grid_c),                                   # reduction axis last
            in_specs=[
                pl.BlockSpec((tile_c, tile_d), lambda i, c: (c, i)),  # weights
                pl.BlockSpec((tile_c, 1), lambda i, c: (c, 0)),       # scaled counts
            ],
            out_specs=pl.BlockSpec((1, tile_d), lambda i, c: (0, i)),
            scratch_shapes=[pltpu.VMEM((8, tile_d), jnp.float32)],
        ),
        compiler_params=pltpu.CompilerParams(
            dimension_semantics=("parallel", "arbitrary"),
            vmem_limit_bytes=vmem_limit_bytes),
        cost_estimate=pl.CostEstimate(
            flops=2 * C * D,
            bytes_accessed=C * D * itemsize + D * itemsize + C * 4,
            transcendentals=0),
    )(weights, n_scaled)
    return out[0]


def _reference(weights, num_examples):
    n = num_examples.astype(jnp.float32)
    total = jnp.sum(n)
    return (jnp.sum(weights.astype(jnp.float32) * n.reshape(-1, 1), axis=0)
            / total).astype(weights.dtype)


if __name__ == "__main__":
    key = jax.random.PRNGKey(0)
    k1, k2, k3, k4, k5, k6 = jax.random.split(key, 6)

    # Case 1: tile-aligned shapes (8 clients, 256 flattened params).
    C1, D1 = 8, 256
    w1 = jax.random.normal(k1, (C1, D1), dtype=jnp.float32)
    n1 = jax.random.randint(k2, (C1,), 1, 100).astype(jnp.int32)
    r1 = jax.block_until_ready(aggregate_model(w1, n1))
    assert r1.shape == (D1,)
    assert jnp.allclose(r1, _reference(w1, n1), atol=1e-5, rtol=1e-5), "case1 mismatch"

    # Case 2: ragged shapes (10 clients, 250 params) -> boundary blocks + row mask.
    C2, D2 = 10, 250
    w2 = jax.random.normal(k3, (C2, D2), dtype=jnp.float32)
    n2 = jax.random.randint(k4, (C2,), 1, 100).astype(jnp.int32)
    r2 = jax.block_until_ready(aggregate_model(w2, n2))
    assert r2.shape == (D2,)
    assert jnp.allclose(r2, _reference(w2, n2), atol=1e-5, rtol=1e-5), "case2 mismatch"

    # Case 3: bf16 weights -> chunked f32 accumulation path.
    C3, D3 = 12, 384
    w3 = jax.random.normal(k5, (C3, D3), dtype=jnp.float32).astype(jnp.bfloat16)
    n3 = jax.random.randint(k6, (C3,), 1, 100).astype(jnp.int32)
    r3 = jax.block_until_ready(aggregate_model(w3, n3))
    assert r3.shape == (D3,)
    assert jnp.allclose(r3.astype(jnp.float32),
                        _reference(w3, n3).astype(jnp.float32),
                        atol=3e-2, rtol=3e-2), "case3 mismatch"

    print("KERNEL_OK")
</pallas_src>

<mosaic_0001>
module attributes {stable_mosaic.version = 11 : i64} {
  func.func @kernel(%arg0: i32, %arg1: i32, %arg2: memref<8x128xf32, #tpu.memory_space<vmem>>, %arg3: memref<8x1xf32, #tpu.memory_space<vmem>>, %arg4: memref<1x128xf32, #tpu.memory_space<vmem>>, %arg5: memref<8x128xf32, #tpu.memory_space<vmem>>) attributes {dimension_semantics = [#tpu.dimension_semantics<parallel>, #tpu.dimension_semantics<arbitrary>], iteration_bounds = array<i64: 2, 1>, scalar_prefetch = 0 : i64, scratch_operands = 1 : i64, tpu.core_type = #tpu.core_type<tc>, window_params = [{transform_indices = @transform_0, window_bounds = array<i64: 8, 128>}, {transform_indices = @transform_1, window_bounds = array<i64: 8, 1>}, {transform_indices = @transform_2, window_bounds = array<i64: 1, 128>}]} {
    %c0_i32 = arith.constant 0 : i32
    %0 = arith.cmpi eq, %arg1, %c0_i32 : i32
    %1 = arith.extui %0 : i1 to i32
    %c0_i32_0 = arith.constant 0 : i32
    %2 = arith.cmpi ne, %1, %c0_i32_0 : i32
    scf.if %2 {
      %cst = arith.constant 0.000000e+00 : f32
      %13 = vector.broadcast %cst : f32 to vector<8x128xf32>
      %c0_10 = arith.constant 0 : index
      %c0_11 = arith.constant 0 : index
      %14 = vector.load %arg5[%c0_10, %c0_11] : memref<8x128xf32, #tpu.memory_space<vmem>>, vector<8x128xf32>
      tpu.vector_store %arg5[%c0_10, %c0_11], %13 {strides = array<i32>} : memref<8x128xf32, #tpu.memory_space<vmem>>, vector<8x128xf32>,
    } else {
    }
    %c0 = arith.constant 0 : index
    %c0_1 = arith.constant 0 : index
    %3 = vector.load %arg3[%c0, %c0_1] : memref<8x1xf32, #tpu.memory_space<vmem>>, vector<8x1xf32>
    %c0_2 = arith.constant 0 : index
    %c0_3 = arith.constant 0 : index
    %4 = vector.load %arg2[%c0_2, %c0_3] : memref<8x128xf32, #tpu.memory_space<vmem>>, vector<8x128xf32>
    %c0_4 = arith.constant 0 : index
    %c0_5 = arith.constant 0 : index
    %5 = vector.load %arg5[%c0_4, %c0_5] : memref<8x128xf32, #tpu.memory_space<vmem>>, vector<8x128xf32>
    %6 = vector.broadcast %3 : vector<8x1xf32> to vector<8x128xf32>
    %7 = arith.mulf %4, %6 : vector<8x128xf32>
    %8 = arith.addf %5, %7 : vector<8x128xf32>
    %c0_6 = arith.constant 0 : index
    %c0_7 = arith.constant 0 : index
    %9 = vector.load %arg5[%c0_6, %c0_7] : memref<8x128xf32, #tpu.memory_space<vmem>>, vector<8x128xf32>
    tpu.vector_store %arg5[%c0_6, %c0_7], %8 {strides = array<i32>} : memref<8x128xf32, #tpu.memory_space<vmem>>, vector<8x128xf32>,
    %c0_i32_8 = arith.constant 0 : i32
    %10 = arith.cmpi eq, %arg1, %c0_i32_8 : i32
    %11 = arith.extui %10 : i1 to i32
    %c0_i32_9 = arith.constant 0 : i32
    %12 = arith.cmpi ne, %11, %c0_i32_9 : i32
    scf.if %12 {
      %c0_10 = arith.constant 0 : index
      %c0_11 = arith.constant 0 : index
      %13 = vector.load %arg5[%c0_10, %c0_11] : memref<8x128xf32, #tpu.memory_space<vmem>>, vector<8x128xf32>
      %cst = arith.constant dense<0.000000e+00> : vector<128xf32>
      %14 = vector.multi_reduction <add>, %13, %cst [0] : vector<8x128xf32> to vector<128xf32>
      %15 = vector.shape_cast %14 : vector<128xf32> to vector<1x128xf32>
      %c0_12 = arith.constant 0 : index
      %c0_13 = arith.constant 0 : index
      %16 = vector.load %arg4[%c0_12, %c0_13] : memref<1x128xf32, #tpu.memory_space<vmem>>, vector<1x128xf32>
      tpu.vector_store %arg4[%c0_12, %c0_13], %15 {strides = array<i32>} : memref<1x128xf32, #tpu.memory_space<vmem>>, vector<1x128xf32>,
    } else {
    }
    return
  }
  func.func @transform_0(%arg0: i32, %arg1: i32) -> (i32, i32) {
    %c0_i32 = arith.constant 0 : i32
    return %arg1, %arg0 : i32, i32
  }
  func.func @transform_1(%arg0: i32, %arg1: i32) -> (i32, i32) {
    %c0_i32 = arith.constant 0 : i32
    %c0_i32_0 = arith.constant 0 : i32
    return %arg1, %c0_i32 : i32, i32
  }
  func.func @transform_2(%arg0: i32, %arg1: i32) -> (i32, i32) {
    %c0_i32 = arith.constant 0 : i32
    %c0_i32_0 = arith.constant 0 : i32
    return %c0_i32, %arg0 : i32, i32
  }
}

</mosaic_0001>

<llo_original>
// kernel: tpu_custom_call.1
$region0: #{tpu_custom_call.1}
  #allocation0 [shape = 'u32[]', space=smem, size = 0x4, offset = 0x4, fixed_abs, tag = 'smem constant byte address 0x4 - core index']
  #allocation1 [shape = 'u32[144,128]{1,0:T(1,128)}', space=vmem, size = 0x12000, scoped, tag = 'internal scratch']
  #allocation2 [shape = 'f32[8,128]{1,0:T(8,128)}', space=vmem, size = 0x1000, scoped, tag = 'scratch operand']
  %s0 = inlined_call_operand.hbm [shape: f32[8,256], index: 0, kind: input, shape index: {}]
  %s1 = inlined_call_operand.hbm [shape: f32[8,1], index: 1, kind: input, shape index: {}]
  %s2 = inlined_call_operand.hbm [shape: f32[1,256], index: 2, kind: output, shape index: {}]
  %s3 = sld [smem:[#allocation0]]
  $region57: #{tpu_custom_call.1} parent=0
    _
  %s5 = ssub.s32 1, %s3
  %s6 = scalar_select 0, %s5, %s3
  $region1: #{tpu_custom_call.1} parent=0
    #allocation3 [shape = 'u8[8192]{0}', space=vmem, size = 0x2000, scoped, tag = 'input window, operand 0']
    #allocation4 [shape = 's32[2]{0}', space=sflag, size = 0x8, scoped, tag = 'scoped memory for tpu_custom_call.1']
    #allocation5 [shape = 's32[2]{0}', space=sflag, size = 0x8, scoped, tag = 'scoped memory for tpu_custom_call.1']
    #allocation6 [shape = 'u8[4096]{0}', space=vmem, size = 0x1000, scoped, tag = 'input window, operand 1, single buffered']
    #allocation7 [shape = 's32[1]{0}', space=sflag, size = 0x4, scoped, tag = 'scoped memory for tpu_custom_call.1']
    #allocation8 [shape = 'u8[1024]{0}', space=vmem, size = 0x400, scoped, tag = 'output window, operand 0']
    %7 = vsyncpa [#allocation4], 0
    %s8 = scalar_lea.sflag [#allocation4], 1
    %9 = vsyncpa %s8, 0
    %10 = vsyncpa [#allocation7], 0
    %11 = vsyncpa [#allocation5], 0
    %s12 = scalar_lea.sflag [#allocation5], 1
    %13 = vsyncpa %s12, 0
    loop: start=0, step=1, limit=4
    $region2: #{tpu_custom_call.1} parent=1 // loop_pre_header
      _
    $region3: #{tpu_custom_call.1} parent=1 // loop_header
      %s15 = sphi 0, %s19
      %p16 = scmp.ge.s32.totalorder %s15, 4
      %s22 = sphi 0, %s34
      %s23 = sphi 0, %s30
      %s24 = sphi 0, %s22
      %s25 = sphi 0, %s23
      %s26 = sphi 0, %s24
      %s27 = sphi 0, %s25
      %s39 = sphi 0, %s41
      %s42 = sphi 0, %s39
      %s43 = sphi 0, %s42
      %s59 = sphi 0, %s43
      %s65 = sphi 0, %s67
      %s68 = sphi 0, %s65
      %s69 = sphi 0, %s68
      %s85 = sphi 0, %s69
      %s91 = sphi 0, %s93
      %s94 = sphi 0, %s91
      %s95 = sphi 0, %s94
      %s111 = sphi 0, %s95
    $region4: #{tpu_custom_call.1} parent=1 // loop_header_branch
      %18 = sbr.rel (%p16) target = $region8
    $region5: #{tpu_custom_call.1} parent=1 // loop_body
      %s20 = ssub.s32 %s15, 1
      %s21 = ssub.s32 %s15, 2
      %s28 = sadd.s32 1, %s23
      %p29 = scmp.ge.s32.totalorder %s28, 1
      %s30 = scalar_select %p29, 0, %s28
      %s31 = sadd.s32 1, %s22
      %s32 = scalar_select %p29, %s31, %s22
      %p33 = scmp.ge.s32.totalorder %s32, 2
      %s34 = scalar_select %p33, 0, %s32
      %s35 = ssub.s32 %s23, %s30
      %s36 = ssub.s32 %s22, %s34
      %s37 = sor.u32 %s35, %s36
      %p38 = scmp.eq.s32.totalorder %s37, 0
      %s40 = sadd.s32 %s39, 1
      %s41 = scalar_select %p38, %s39, %s40
      %p44 = pneg %p38
      %p45 = scmp.eq.s32.totalorder %s15, 1
      %p46 = por %p44, %p45
      %p47 = scmp.ne.s32.totalorder %s39, %s42
      %p48 = scmp.eq.s32.totalorder %s15, 0
      %p49 = por %p47, %p48
      %p50 = scmp.ne.s32.totalorder %s39, %s42
      %p51 = scmp.eq.s32.totalorder %s20, 1
      %p52 = por %p50, %p51
      %p53 = scmp.ne.s32.totalorder %s42, %s43
      %p54 = scmp.eq.s32.totalorder %s20, 0
      %p55 = por %p53, %p54
      %p56 = scmp.ne.s32.totalorder %s42, %s43
      %p57 = scmp.eq.s32.totalorder %s21, 1
      %p58 = por %p56, %p57
      %p60 = scmp.ne.s32.totalorder %s43, %s59
      %p61 = scmp.eq.s32.totalorder %s21, 0
      %p62 = por %p60, %p61
      %s63 = ssub.s32 %s23, %s30
      %p64 = scmp.eq.s32.totalorder %s63, 0
      %s66 = sadd.s32 %s65, 1
      %s67 = scalar_select %p64, %s65, %s66
      %p70 = pneg %p64
      %p71 = scmp.eq.s32.totalorder %s15, 1
      %p72 = por %p70, %p71
      %p73 = scmp.ne.s32.totalorder %s65, %s68
      %p74 = scmp.eq.s32.totalorder %s15, 0
      %p75 = por %p73, %p74
      %p76 = scmp.ne.s32.totalorder %s65, %s68
      %p77 = scmp.eq.s32.totalorder %s20, 1
      %p78 = por %p76, %p77
      %p79 = scmp.ne.s32.totalorder %s68, %s69
      %p80 = scmp.eq.s32.totalorder %s20, 0
      %p81 = por %p79, %p80
      %p82 = scmp.ne.s32.totalorder %s68, %s69
      %p83 = scmp.eq.s32.totalorder %s21, 1
      %p84 = por %p82, %p83
      %p86 = scmp.ne.s32.totalorder %s69, %s85
      %p87 = scmp.eq.s32.totalorder %s21, 0
      %p88 = por %p86, %p87
      %s89 = ssub.s32 %s22, %s34
      %p90 = scmp.eq.s32.totalorder %s89, 0
      %s92 = sadd.s32 %s91, 1
      %s93 = scalar_select %p90, %s91, %s92
      %p96 = pneg %p90
      %p97 = scmp.eq.s32.totalorder %s15, 1
      %p98 = por %p96, %p97
      %p99 = scmp.ne.s32.totalorder %s91, %s94
      %p100 = scmp.eq.s32.totalorder %s15, 0
      %p101 = por %p99, %p100
      %p102 = scmp.ne.s32.totalorder %s91, %s94
      %p103 = scmp.eq.s32.totalorder %s20, 1
      %p104 = por %p102, %p103
      %p105 = scmp.ne.s32.totalorder %s94, %s95
      %p106 = scmp.eq.s32.totalorder %s20, 0
      %p107 = por %p105, %p106
      %p108 = scmp.ne.s32.totalorder %s94, %s95
      %p109 = scmp.eq.s32.totalorder %s21, 1
      %p110 = por %p108, %p109
      %p112 = scmp.ne.s32.totalorder %s95, %s111
      %p113 = scmp.eq.s32.totalorder %s21, 0
      %p114 = por %p112, %p113
      %p115 = scmp.le.s32.totalorder 1, %s15
      %p116 = scmp.lt.s32.totalorder %s15, 3
      %p117 = pnand %p115, %p116
      %p118 = pneg %p117
      // Predicated region
      $region9: #{tpu_custom_call.1} parent=5 // pred_check
        _
      $region10: #{tpu_custom_call.1} parent=5 // pred_check_branch
        %120 = sbr.rel (%p117) target = $region12
      $region11: #{tpu_custom_call.1} parent=5 // pred_region
        %s121 = ssub.s32 %s15, 1
        // Predicated region
        $region13: #{tpu_custom_call.1} parent=11 // pred_check
          %p122 = pneg %p81
        $region14: #{tpu_custom_call.1} parent=11 // pred_check_branch
          %124 = sbr.rel (%p122) target = $region16
        $region15: #{tpu_custom_call.1} parent=11 // pred_region
          %s126 = ssub.s32 128, 128
          %127 = vsyncadd [#allocation7], %s126
          %s128 = smul.addr %s25, 128
          %s129 = scalar_lea.hbm %s1, %s128
          %s131 = sshll.u32 [#allocation6], 4
          %s132 = int_to_ptr.vmem [resolvable:$true] %s131
          %134 = dma.hbm_to_vmem [thread:$0]  %s129, 128, %s132, [#allocation7]
        $region16: #{tpu_custom_call.1} parent=11 // pred_fallthru
          _
      $region12: #{tpu_custom_call.1} parent=5 // pred_fallthru
        _
      %p135 = scmp.lt.s32.totalorder %s15, 2
      // Predicated region
      $region17: #{tpu_custom_call.1} parent=5 // pred_check
        %p136 = pneg %p135
      $region18: #{tpu_custom_call.1} parent=5 // pred_check_branch
        %138 = sbr.rel (%p136) target = $region20
      $region19: #{tpu_custom_call.1} parent=5 // pred_region
        // Predicated region
        $region21: #{tpu_custom_call.1} parent=19 // pred_check
          %p139 = pneg %p49
        $region22: #{tpu_custom_call.1} parent=19 // pred_check_branch
          %141 = sbr.rel (%p139) target = $region24
        $region23: #{tpu_custom_call.1} parent=19 // pred_region
          %s142 = sand.u32 %s39, 1
          %s143 = scalar_lea.sflag [#allocation4], %s142
          %s144 = sand.u32 %s39, 1
          %s145 = smul.addr %s144, 8
          %s146 = scalar_lea.vmem [#allocation3], %s145
          %s148 = ssub.s32 128, 128
          %149 = vsyncadd %s143, %s148
          %s150 = smul.addr %s23, 2
          %s151 = sadd.s32 %s22, %s150
          %s152 = smul.addr %s151, 128
          %s153 = scalar_lea.hbm %s0, %s152
          %s155 = sshll.u32 %s146, 4
          %s156 = int_to_ptr.vmem [resolvable:$true] %s155
          %158 = dma.hbm_to_vmem [thread:$0]  %s153, 128, %s156, %s143
        $region24: #{tpu_custom_call.1} parent=19 // pred_fallthru
          _
      $region20: #{tpu_custom_call.1} parent=5 // pred_fallthru
        _
      %p159 = scmp.le.s32.totalorder 1, %s15
      %p160 = scmp.lt.s32.totalorder %s15, 3
      %p161 = pnand %p159, %p160
      %p162 = pneg %p161
      // Predicated region
      $region25: #{tpu_custom_call.1} parent=5 // pred_check
        _
      $region26: #{tpu_custom_call.1} parent=5 // pred_check_branch
        %164 = sbr.rel (%p161) target = $region28
      $region27: #{tpu_custom_call.1} parent=5 // pred_region
        %s165 = ssub.s32 %s15, 1
        %s166 = sand.u32 %s42, 1
        %s167 = scalar_lea.sflag [#allocation4], %s166
        %s168 = sand.u32 %s42, 1
        %s169 = smul.addr %s168, 8
        %s170 = scalar_lea.vmem [#allocation3], %s169
        // Predicated region
        $region29: #{tpu_custom_call.1} parent=27 // pred_check
          %p171 = pneg %p55
        $region30: #{tpu_custom_call.1} parent=27 // pred_check_branch
          %173 = sbr.rel (%p171) target = $region32
        $region31: #{tpu_custom_call.1} parent=27 // pred_region
          %174 = dma.done %s167, 128
        $region32: #{tpu_custom_call.1} parent=27 // pred_fallthru
          _
        // Predicated region
        $region33: #{tpu_custom_call.1} parent=27 // pred_check
          %p175 = pneg %p81
        $region34: #{tpu_custom_call.1} parent=27 // pred_check_branch
          %177 = sbr.rel (%p175) target = $region36
        $region35: #{tpu_custom_call.1} parent=27 // pred_region
          %178 = dma.done [#allocation7], 128
        $region36: #{tpu_custom_call.1} parent=27 // pred_fallthru
          _
        %s179 = sand.u32 %s42, 1
        %s180 = scalar_lea.sflag [#allocation4], %s179
        %s181 = sand.u32 %s42, 1
        %s182 = smul.addr %s181, 8
        %s183 = scalar_lea.vmem [#allocation3], %s182
        %p184 = pneg %p55
        %p185 = pneg %p52
        %p186 = pneg %p81
        %p187 = pneg %p78
        %p188 = pneg %p107
        %p189 = pneg %p104
        %s190 = sand.u32 %s94, 1
        %s191 = scalar_lea.sflag [#allocation5], %s190
        %s192 = sand.u32 %s94, 1
        %s193 = scalar_lea.vmem [#allocation8], %s192
        %p194 = scmp.eq.s32.totalorder %s25, 0
        // Predicated region
        $region37: #{tpu_custom_call.1} parent=27 // pred_check
          %p195 = pneg %p194
        $region38: #{tpu_custom_call.1} parent=27 // pred_check_branch
          %197 = sbr.rel (%p195) target = $region40
        $region39: #{tpu_custom_call.1} parent=27 // pred_region
          %198 = vst [vmem:[#allocation2] sm:$0xff] 0.0
        $region40: #{tpu_custom_call.1} parent=27 // pred_fallthru
          _
        %v199 = vld [vmem:[#allocation6] sm:$0xff]
        %v200 = vld [vmem:[%s170] sm:$0xff]
        %v201 = vld [vmem:[#allocation2] sm:$0xff]
        %203 = vset.pattern.permute.xlu0 0
        %204 = vperm.xlu0 %203, %v199
        %v205 = vpop.permute.xlu0 %204
        %v207 = vmul.f32 %v200, %v205
        %v208 = vadd.f32 %v201, %v207
        %209 = vst [vmem:[#allocation2] sm:$0xff] %v208
        // Predicated region
        $region41: #{tpu_custom_call.1} parent=27 // pred_check
          %p210 = pneg %p194
        $region42: #{tpu_custom_call.1} parent=27 // pred_check_branch
          %212 = sbr.rel (%p210) target = $region44
        $region43: #{tpu_custom_call.1} parent=27 // pred_region
          %v213 = vld [vmem:[#allocation2] sm:$0xff]
          %v214 = vrot.slane %v213, 4
          %v215 = vadd.f32 %v213, %v214
          %v216 = vrot.slane %v215, 2
          %v217 = vadd.f32 %v215, %v216
          %v218 = vrot.slane %v217, 1
          %v219 = vadd.f32 %v217, %v218
          %220 = vst [vmem:[%s193] sm:$0x1] %v219
        $region44: #{tpu_custom_call.1} parent=27 // pred_fallthru
          _
        %s221 = sand.u32 %s94, 1
        %s222 = scalar_lea.sflag [#allocation5], %s221
        %s223 = sand.u32 %s94, 1
        %s224 = scalar_lea.vmem [#allocation8], %s223
        // Predicated region
        $region45: #{tpu_custom_call.1} parent=27 // pred_check
          %p225 = pneg %p104
        $region46: #{tpu_custom_call.1} parent=27 // pred_check_branch
          %227 = sbr.rel (%p225) target = $region48
        $region47: #{tpu_custom_call.1} parent=27 // pred_region
          %s229 = ssub.s32 16, 16
          %230 = vsyncadd %s222, %s229
          %s231 = smul.addr %s24, 16
          %s232 = scalar_lea.hbm %s2, %s231
          %s234 = sshll.u32 %s224, 4
          %s235 = int_to_ptr.vmem [resolvable:$true] %s234
          %237 = dma.vmem_to_hbm [thread:$0]  %s235, 16, %s232, %s222
        $region48: #{tpu_custom_call.1} parent=27 // pred_fallthru
          _
      $region28: #{tpu_custom_call.1} parent=5 // pred_fallthru
        _
      %p238 = scmp.le.s32.totalorder 2, %s15
      // Predicated region
      $region49: #{tpu_custom_call.1} parent=5 // pred_check
        %p239 = pneg %p238
      $region50: #{tpu_custom_call.1} parent=5 // pred_check_branch
        %241 = sbr.rel (%p239) target = $region52
      $region51: #{tpu_custom_call.1} parent=5 // pred_region
        %s242 = ssub.s32 %s15, 2
        // Predicated region
        $region53: #{tpu_custom_call.1} parent=51 // pred_check
          %p243 = pneg %p110
        $region54: #{tpu_custom_call.1} parent=51 // pred_check_branch
          %245 = sbr.rel (%p243) target = $region56
        $region55: #{tpu_custom_call.1} parent=51 // pred_region
          %s246 = sand.u32 %s95, 1
          %s247 = scalar_lea.sflag [#allocation5], %s246
          %s248 = sand.u32 %s95, 1
          %s249 = scalar_lea.vmem [#allocation8], %s248
          %250 = dma.done %s247, 16
        $region56: #{tpu_custom_call.1} parent=51 // pred_fallthru
          _
      $region52: #{tpu_custom_call.1} parent=5 // pred_fallthru
        _
    $region6: #{tpu_custom_call.1} parent=1 // loop_footer
      %s19 = sadd.s32 1, %s15
    $region7: #{tpu_custom_call.1} parent=1 // loop_footer_branch
      %14 = sbr.rel target = $region3
    $region8: #{tpu_custom_call.1} parent=1 // loop_exit
      _
    %251 = vsyncpa [#allocation4], 1
    %s252 = scalar_lea.sflag [#allocation4], 1
    %253 = vsyncpa %s252, 1
    %254 = vsyncpa [#allocation7], 1
    %255 = vsyncpa [#allocation5], 1
    %s256 = scalar_lea.sflag [#allocation5], 1
    %257 = vsyncpa %s256, 1

</llo_original>
